<compile_context>
chip_gen: v7x
topology: tpu7x:2x2x1
jax: 0.10.0
libtpu: 0.0.40
codegen_flags: <defaults>
</compile_context>

<pallas_src>
import functools
import math

import numpy as np
import jax
import jax.numpy as jnp
from jax.experimental import pallas as pl
from jax.experimental.pallas import tpu as pltpu

LANE = 128
SUBLANE = 8


def _dice_kernel(p_ref, t_ref, o_ref, acc_ref, *, smooth):
    """One (1, BR, 128) tile of one batch element.

    acc_ref (SMEM, shape (3,)):  [sum(p*t), sum(p), sum(t)] for the current batch.
    o_ref   (VMEM, (1, 8, 128)): per-batch output block, written on the last tile.
    """
    j = pl.program_id(1)

    @pl.when(j == 0)
    def _init():
        acc_ref[0] = 0.0
        acc_ref[1] = 0.0
        acc_ref[2] = 0.0

    # Cast after the DMA (inputs stream in their native dtype).
    p = p_ref[...].astype(jnp.float32)   # (1, BR, 128)
    t = t_ref[...].astype(jnp.float32)   # (1, BR, 128)

    acc_ref[0] += jnp.sum(p * t)
    acc_ref[1] += jnp.sum(p)
    acc_ref[2] += jnp.sum(t)

    @pl.when(j == pl.num_programs(1) - 1)
    def _finalize():
        num = acc_ref[0]
        den = acc_ref[1] + acc_ref[2] + smooth
        loss = 1.0 - 2.0 * num / den          # one scalar divide per batch element
        o_ref[...] = jnp.full(o_ref.shape, loss, dtype=o_ref.dtype)


def binary_dice_loss(predict, target, *, smooth=1.0, block_rows=512):
    """Pallas implementation of BinaryDiceLoss_.forward. Returns per-sample loss (B,)."""
    assert predict.shape[0] == target.shape[0], "predict & target batch size don't match"
    B = predict.shape[0]

    p2 = predict.reshape(B, -1)
    t2 = target.reshape(B, -1)
    N = p2.shape[1]

    # Pad the flattened volume to (rows, 128) with rows a multiple of the block rows.
    rows_needed = -(-N // LANE)                                   # ceil(N / 128)
    br = max(SUBLANE, min(block_rows, -(-rows_needed // SUBLANE) * SUBLANE))
    br = -(-br // SUBLANE) * SUBLANE                              # multiple of 8
    rows = -(-rows_needed // br) * br                             # multiple of br
    n_pad = rows * LANE - N
    if n_pad:
        # Zero padding is exact for this loss (adds 0 to every sum).
        p2 = jnp.pad(p2, ((0, 0), (0, n_pad)))
        t2 = jnp.pad(t2, ((0, 0), (0, n_pad)))

    p3 = p2.reshape(B, rows, LANE)
    t3 = t2.reshape(B, rows, LANE)
    nt = rows // br

    kernel = functools.partial(_dice_kernel, smooth=float(smooth))
    out = pl.pallas_call(
        kernel,
        out_shape=jax.ShapeDtypeStruct((B, SUBLANE, LANE), jnp.float32),
        grid=(B, nt),
        in_specs=[
            pl.BlockSpec((1, br, LANE), lambda b, j: (b, j, 0)),
            pl.BlockSpec((1, br, LANE), lambda b, j: (b, j, 0)),
        ],
        out_specs=pl.BlockSpec((1, SUBLANE, LANE), lambda b, j: (b, 0, 0)),
        scratch_shapes=[pltpu.SMEM((3,), jnp.float32)],
        compiler_params=pltpu.CompilerParams(
            dimension_semantics=("parallel", "arbitrary"),
        ),
    )(p3, t3)

    return out[:, 0, 0]


# ---------------------------- pure-JAX reference ------------------------------------
def reference(predict, target, smooth=1.0):
    B = predict.shape[0]
    p = predict.reshape(B, -1).astype(jnp.float32)
    t = target.reshape(B, -1).astype(jnp.float32)
    num = jnp.sum(p * t, axis=1)
    den = jnp.sum(p, axis=1) + jnp.sum(t, axis=1) + smooth
    return 1.0 - 2.0 * num / den


if __name__ == "__main__":
    key = jax.random.PRNGKey(0)

    test_cases = [
        # (shape, block_rows)   -- shapes consistent with (B, C, H, W) probability maps
        ((2, 4, 16, 16), 512),   # N = 1024, single tile
        ((2, 4, 32, 32), 8),     # N = 4096 -> 4 tiles per batch: exercises accumulation
        ((2, 3, 7, 11), 512),    # N = 231: exercises the zero-padding path
    ]

    ok = True
    for shape, br in test_cases:
        k1, k2, key = jax.random.split(key, 3)
        predict = jax.nn.sigmoid(jax.random.normal(k1, shape, jnp.float32))
        target = (jax.random.uniform(k2, shape) < 0.5).astype(jnp.float32)

        out = binary_dice_loss(predict, target, smooth=1.0, block_rows=br)
        out = jax.block_until_ready(out)
        ref = reference(predict, target, smooth=1.0)

        np.testing.assert_allclose(np.asarray(out), np.asarray(ref), rtol=1e-5, atol=1e-5)
        ok = ok and True

    if ok:
        print("KERNEL_OK")
</pallas_src>

<mosaic_0001>
module attributes {stable_mosaic.version = 11 : i64} {
  func.func @_dice_kernel(%arg0: i32, %arg1: i32, %arg2: memref<1x8x128xf32, #tpu.memory_space<vmem>>, %arg3: memref<1x8x128xf32, #tpu.memory_space<vmem>>, %arg4: memref<1x8x128xf32, #tpu.memory_space<vmem>>, %arg5: memref<3xf32, #tpu.memory_space<smem>>) attributes {dimension_semantics = [#tpu.dimension_semantics<parallel>, #tpu.dimension_semantics<arbitrary>], iteration_bounds = array<i64: 2, 1>, scalar_prefetch = 0 : i64, scratch_operands = 1 : i64, tpu.core_type = #tpu.core_type<tc>, window_params = [{transform_indices = @transform_0, window_bounds = array<i64: 1, 8, 128>}, {transform_indices = @transform_1, window_bounds = array<i64: 1, 8, 128>}, {transform_indices = @transform_2, window_bounds = array<i64: 1, 8, 128>}]} {
    %c0_i32 = arith.constant 0 : i32
    %0 = arith.cmpi eq, %arg1, %c0_i32 : i32
    %1 = arith.extui %0 : i1 to i32
    %c0_i32_0 = arith.constant 0 : i32
    %2 = arith.cmpi ne, %1, %c0_i32_0 : i32
    scf.if %2 {
      %cst_14 = arith.constant 0.000000e+00 : f32
      %c0_15 = arith.constant 0 : index
      %30 = memref.load %arg5[%c0_15] : memref<3xf32, #tpu.memory_space<smem>>
      memref.store %cst_14, %arg5[%c0_15] : memref<3xf32, #tpu.memory_space<smem>>
      %cst_16 = arith.constant 0.000000e+00 : f32
      %c1_17 = arith.constant 1 : index
      %31 = memref.load %arg5[%c1_17] : memref<3xf32, #tpu.memory_space<smem>>
      memref.store %cst_16, %arg5[%c1_17] : memref<3xf32, #tpu.memory_space<smem>>
      %cst_18 = arith.constant 0.000000e+00 : f32
      %c2_19 = arith.constant 2 : index
      %32 = memref.load %arg5[%c2_19] : memref<3xf32, #tpu.memory_space<smem>>
      memref.store %cst_18, %arg5[%c2_19] : memref<3xf32, #tpu.memory_space<smem>>
    } else {
    }
    %c0 = arith.constant 0 : index
    %c0_1 = arith.constant 0 : index
    %c0_2 = arith.constant 0 : index
    %3 = vector.load %arg2[%c0, %c0_1, %c0_2] : memref<1x8x128xf32, #tpu.memory_space<vmem>>, vector<1x8x128xf32>
    %c0_3 = arith.constant 0 : index
    %c0_4 = arith.constant 0 : index
    %c0_5 = arith.constant 0 : index
    %4 = vector.load %arg3[%c0_3, %c0_4, %c0_5] : memref<1x8x128xf32, #tpu.memory_space<vmem>>, vector<1x8x128xf32>
    %c0_6 = arith.constant 0 : index
    %5 = memref.load %arg5[%c0_6] : memref<3xf32, #tpu.memory_space<smem>>
    %6 = arith.mulf %3, %4 : vector<1x8x128xf32>
    %7 = vector.shape_cast %6 : vector<1x8x128xf32> to vector<1x1x8x128xf32>
    %cst = arith.constant dense<0.000000e+00> : vector<1xf32>
    %8 = vector.multi_reduction <add>, %7, %cst [1, 2, 3] : vector<1x1x8x128xf32> to vector<1xf32>
    %9 = vector.shape_cast %8 : vector<1xf32> to vector<1x1x1x1xf32>
    %10 = vector.extract %9[0, 0, 0, 0] : f32 from vector<1x1x1x1xf32>
    %11 = arith.addf %5, %10 : f32
    %c0_7 = arith.constant 0 : index
    %12 = memref.load %arg5[%c0_7] : memref<3xf32, #tpu.memory_space<smem>>
    memref.store %11, %arg5[%c0_7] : memref<3xf32, #tpu.memory_space<smem>>
    %c1 = arith.constant 1 : index
    %13 = memref.load %arg5[%c1] : memref<3xf32, #tpu.memory_space<smem>>
    %14 = vector.shape_cast %3 : vector<1x8x128xf32> to vector<1x1x8x128xf32>
    %cst_8 = arith.constant dense<0.000000e+00> : vector<1xf32>
    %15 = vector.multi_reduction <add>, %14, %cst_8 [1, 2, 3] : vector<1x1x8x128xf32> to vector<1xf32>
    %16 = vector.shape_cast %15 : vector<1xf32> to vector<1x1x1x1xf32>
    %17 = vector.extract %16[0, 0, 0, 0] : f32 from vector<1x1x1x1xf32>
    %18 = arith.addf %13, %17 : f32
    %c1_9 = arith.constant 1 : index
    %19 = memref.load %arg5[%c1_9] : memref<3xf32, #tpu.memory_space<smem>>
    memref.store %18, %arg5[%c1_9] : memref<3xf32, #tpu.memory_space<smem>>
    %c2 = arith.constant 2 : index
    %20 = memref.load %arg5[%c2] : memref<3xf32, #tpu.memory_space<smem>>
    %21 = vector.shape_cast %4 : vector<1x8x128xf32> to vector<1x1x8x128xf32>
    %cst_10 = arith.constant dense<0.000000e+00> : vector<1xf32>
    %22 = vector.multi_reduction <add>, %21, %cst_10 [1, 2, 3] : vector<1x1x8x128xf32> to vector<1xf32>
    %23 = vector.shape_cast %22 : vector<1xf32> to vector<1x1x1x1xf32>
    %24 = vector.extract %23[0, 0, 0, 0] : f32 from vector<1x1x1x1xf32>
    %25 = arith.addf %20, %24 : f32
    %c2_11 = arith.constant 2 : index
    %26 = memref.load %arg5[%c2_11] : memref<3xf32, #tpu.memory_space<smem>>
    memref.store %25, %arg5[%c2_11] : memref<3xf32, #tpu.memory_space<smem>>
    %c0_i32_12 = arith.constant 0 : i32
    %27 = arith.cmpi eq, %arg1, %c0_i32_12 : i32
    %28 = arith.extui %27 : i1 to i32
    %c0_i32_13 = arith.constant 0 : i32
    %29 = arith.cmpi ne, %28, %c0_i32_13 : i32
    scf.if %29 {
      %c0_14 = arith.constant 0 : index
      %30 = memref.load %arg5[%c0_14] : memref<3xf32, #tpu.memory_space<smem>>
      %c1_15 = arith.constant 1 : index
      %31 = memref.load %arg5[%c1_15] : memref<3xf32, #tpu.memory_space<smem>>
      %c2_16 = arith.constant 2 : index
      %32 = memref.load %arg5[%c2_16] : memref<3xf32, #tpu.memory_space<smem>>
      %33 = arith.addf %31, %32 : f32
      %cst_17 = arith.constant 1.000000e+00 : f32
      %34 = arith.addf %33, %cst_17 : f32
      %cst_18 = arith.constant 2.000000e+00 : f32
      %35 = arith.mulf %cst_18, %30 : f32
      %36 = arith.divf %35, %34 : f32
      %cst_19 = arith.constant 1.000000e+00 : f32
      %37 = arith.subf %cst_19, %36 : f32
      %38 = vector.broadcast %37 : f32 to vector<1x8x128xf32>
      %c0_20 = arith.constant 0 : index
      %c0_21 = arith.constant 0 : index
      %c0_22 = arith.constant 0 : index
      %39 = vector.load %arg4[%c0_20, %c0_21, %c0_22] : memref<1x8x128xf32, #tpu.memory_space<vmem>>, vector<1x8x128xf32>
      tpu.vector_store %arg4[%c0_20, %c0_21, %c0_22], %38 {strides = array<i32>} : memref<1x8x128xf32, #tpu.memory_space<vmem>>, vector<1x8x128xf32>,
    } else {
    }
    return
  }
  func.func @transform_0(%arg0: i32, %arg1: i32) -> (i32, i32, i32) {
    %c0_i32 = arith.constant 0 : i32
    %c0_i32_0 = arith.constant 0 : i32
    return %arg0, %arg1, %c0_i32 : i32, i32, i32
  }
  func.func @transform_1(%arg0: i32, %arg1: i32) -> (i32, i32, i32) {
    %c0_i32 = arith.constant 0 : i32
    %c0_i32_0 = arith.constant 0 : i32
    return %arg0, %arg1, %c0_i32 : i32, i32, i32
  }
  func.func @transform_2(%arg0: i32, %arg1: i32) -> (i32, i32, i32) {
    %c0_i32 = arith.constant 0 : i32
    %c0_i32_0 = arith.constant 0 : i32
    %c0_i32_1 = arith.constant 0 : i32
    return %arg0, %c0_i32, %c0_i32_0 : i32, i32, i32
  }
}

</mosaic_0001>

<llo_original>
// kernel: tpu_custom_call.1
$region0: #{tpu_custom_call.1}
  #allocation0 [shape = 'u32[]', space=smem, size = 0x4, offset = 0x4, fixed_abs, tag = 'smem constant byte address 0x4 - core index']
  #allocation1 [shape = 'u32[144,128]{1,0:T(1,128)}', space=vmem, size = 0x12000, scoped, tag = 'internal scratch']
  #allocation2 [shape = 'f32[3]{0:T(128)}', space=smem, size = 0x200, scoped, tag = 'scratch operand']
  %s0 = inlined_call_operand.hbm [shape: f32[2,8,128], index: 0, kind: input, shape index: {}]
  %s1 = inlined_call_operand.hbm [shape: f32[2,8,128], index: 1, kind: input, shape index: {}]
  %s2 = inlined_call_operand.hbm [shape: f32[2,8,128], index: 2, kind: output, shape index: {}]
  %s3 = sld [smem:[#allocation0]]
  $region57: #{tpu_custom_call.1} parent=0
    _
  %s5 = ssub.s32 1, %s3
  %s6 = scalar_select 0, %s5, %s3
  $region1: #{tpu_custom_call.1} parent=0
    #allocation3 [shape = 'u8[8192]{0}', space=vmem, size = 0x2000, scoped, tag = 'input window, operand 0']
    #allocation4 [shape = 's32[2]{0}', space=sflag, size = 0x8, scoped, tag = 'scoped memory for tpu_custom_call.1']
    #allocation5 [shape = 's32[2]{0}', space=sflag, size = 0x8, scoped, tag = 'scoped memory for tpu_custom_call.1']
    #allocation6 [shape = 'u8[8192]{0}', space=vmem, size = 0x2000, scoped, tag = 'input window, operand 1']
    #allocation7 [shape = 's32[2]{0}', space=sflag, size = 0x8, scoped, tag = 'scoped memory for tpu_custom_call.1']
    #allocation8 [shape = 'u8[8192]{0}', space=vmem, size = 0x2000, scoped, tag = 'output window, operand 0']
    %7 = vsyncpa [#allocation4], 0
    %s8 = scalar_lea.sflag [#allocation4], 1
    %9 = vsyncpa %s8, 0
    %10 = vsyncpa [#allocation7], 0
    %s11 = scalar_lea.sflag [#allocation7], 1
    %12 = vsyncpa %s11, 0
    %13 = vsyncpa [#allocation5], 0
    %s14 = scalar_lea.sflag [#allocation5], 1
    %15 = vsyncpa %s14, 0
    loop: start=0, step=1, limit=4
    $region2: #{tpu_custom_call.1} parent=1 // loop_pre_header
      _
    $region3: #{tpu_custom_call.1} parent=1 // loop_header
      %s17 = sphi 0, %s21
      %p18 = scmp.ge.s32.totalorder %s17, 4
      %s24 = sphi 0, %s36
      %s25 = sphi 0, %s32
      %s26 = sphi 0, %s24
      %s27 = sphi 0, %s25
      %s28 = sphi 0, %s26
      %s29 = sphi 0, %s27
      %s41 = sphi 0, %s43
      %s44 = sphi 0, %s41
      %s45 = sphi 0, %s44
      %s61 = sphi 0, %s45
      %s69 = sphi 0, %s71
      %s72 = sphi 0, %s69
      %s73 = sphi 0, %s72
      %s89 = sphi 0, %s73
      %s95 = sphi 0, %s97
      %s98 = sphi 0, %s95
      %s99 = sphi 0, %s98
      %s115 = sphi 0, %s99
    $region4: #{tpu_custom_call.1} parent=1 // loop_header_branch
      %20 = sbr.rel (%p18) target = $region8
    $region5: #{tpu_custom_call.1} parent=1 // loop_body
      %s22 = ssub.s32 %s17, 1
      %s23 = ssub.s32 %s17, 2
      %s30 = sadd.s32 1, %s25
      %p31 = scmp.ge.s32.totalorder %s30, 1
      %s32 = scalar_select %p31, 0, %s30
      %s33 = sadd.s32 1, %s24
      %s34 = scalar_select %p31, %s33, %s24
      %p35 = scmp.ge.s32.totalorder %s34, 2
      %s36 = scalar_select %p35, 0, %s34
      %s37 = ssub.s32 %s24, %s36
      %s38 = ssub.s32 %s25, %s32
      %s39 = sor.u32 %s37, %s38
      %p40 = scmp.eq.s32.totalorder %s39, 0
      %s42 = sadd.s32 %s41, 1
      %s43 = scalar_select %p40, %s41, %s42
      %p46 = pneg %p40
      %p47 = scmp.eq.s32.totalorder %s17, 1
      %p48 = por %p46, %p47
      %p49 = scmp.ne.s32.totalorder %s41, %s44
      %p50 = scmp.eq.s32.totalorder %s17, 0
      %p51 = por %p49, %p50
      %p52 = scmp.ne.s32.totalorder %s41, %s44
      %p53 = scmp.eq.s32.totalorder %s22, 1
      %p54 = por %p52, %p53
      %p55 = scmp.ne.s32.totalorder %s44, %s45
      %p56 = scmp.eq.s32.totalorder %s22, 0
      %p57 = por %p55, %p56
      %p58 = scmp.ne.s32.totalorder %s44, %s45
      %p59 = scmp.eq.s32.totalorder %s23, 1
      %p60 = por %p58, %p59
      %p62 = scmp.ne.s32.totalorder %s45, %s61
      %p63 = scmp.eq.s32.totalorder %s23, 0
      %p64 = por %p62, %p63
      %s65 = ssub.s32 %s24, %s36
      %s66 = ssub.s32 %s25, %s32
      %s67 = sor.u32 %s65, %s66
      %p68 = scmp.eq.s32.totalorder %s67, 0
      %s70 = sadd.s32 %s69, 1
      %s71 = scalar_select %p68, %s69, %s70
      %p74 = pneg %p68
      %p75 = scmp.eq.s32.totalorder %s17, 1
      %p76 = por %p74, %p75
      %p77 = scmp.ne.s32.totalorder %s69, %s72
      %p78 = scmp.eq.s32.totalorder %s17, 0
      %p79 = por %p77, %p78
      %p80 = scmp.ne.s32.totalorder %s69, %s72
      %p81 = scmp.eq.s32.totalorder %s22, 1
      %p82 = por %p80, %p81
      %p83 = scmp.ne.s32.totalorder %s72, %s73
      %p84 = scmp.eq.s32.totalorder %s22, 0
      %p85 = por %p83, %p84
      %p86 = scmp.ne.s32.totalorder %s72, %s73
      %p87 = scmp.eq.s32.totalorder %s23, 1
      %p88 = por %p86, %p87
      %p90 = scmp.ne.s32.totalorder %s73, %s89
      %p91 = scmp.eq.s32.totalorder %s23, 0
      %p92 = por %p90, %p91
      %s93 = ssub.s32 %s24, %s36
      %p94 = scmp.eq.s32.totalorder %s93, 0
      %s96 = sadd.s32 %s95, 1
      %s97 = scalar_select %p94, %s95, %s96
      %p100 = pneg %p94
      %p101 = scmp.eq.s32.totalorder %s17, 1
      %p102 = por %p100, %p101
      %p103 = scmp.ne.s32.totalorder %s95, %s98
      %p104 = scmp.eq.s32.totalorder %s17, 0
      %p105 = por %p103, %p104
      %p106 = scmp.ne.s32.totalorder %s95, %s98
      %p107 = scmp.eq.s32.totalorder %s22, 1
      %p108 = por %p106, %p107
      %p109 = scmp.ne.s32.totalorder %s98, %s99
      %p110 = scmp.eq.s32.totalorder %s22, 0
      %p111 = por %p109, %p110
      %p112 = scmp.ne.s32.totalorder %s98, %s99
      %p113 = scmp.eq.s32.totalorder %s23, 1
      %p114 = por %p112, %p113
      %p116 = scmp.ne.s32.totalorder %s99, %s115
      %p117 = scmp.eq.s32.totalorder %s23, 0
      %p118 = por %p116, %p117
      %p119 = scmp.le.s32.totalorder 1, %s17
      %p120 = scmp.lt.s32.totalorder %s17, 3
      %p121 = pnand %p119, %p120
      %p122 = pneg %p121
      // Predicated region
      $region9: #{tpu_custom_call.1} parent=5 // pred_check
        _
      $region10: #{tpu_custom_call.1} parent=5 // pred_check_branch
        %124 = sbr.rel (%p121) target = $region12
      $region11: #{tpu_custom_call.1} parent=5 // pred_region
        %s125 = ssub.s32 %s17, 1
      $region12: #{tpu_custom_call.1} parent=5 // pred_fallthru
        _
      %p126 = scmp.lt.s32.totalorder %s17, 2
      // Predicated region
      $region13: #{tpu_custom_call.1} parent=5 // pred_check
        %p127 = pneg %p126
      $region14: #{tpu_custom_call.1} parent=5 // pred_check_branch
        %129 = sbr.rel (%p127) target = $region16
      $region15: #{tpu_custom_call.1} parent=5 // pred_region
        // Predicated region
        $region17: #{tpu_custom_call.1} parent=15 // pred_check
          %p130 = pneg %p51
        $region18: #{tpu_custom_call.1} parent=15 // pred_check_branch
          %132 = sbr.rel (%p130) target = $region20
        $region19: #{tpu_custom_call.1} parent=15 // pred_region
          %s133 = sand.u32 %s41, 1
          %s134 = scalar_lea.sflag [#allocation4], %s133
          %s135 = sand.u32 %s41, 1
          %s136 = smul.addr %s135, 8
          %s137 = scalar_lea.vmem [#allocation3], %s136
          %s139 = ssub.s32 128, 128
          %140 = vsyncadd %s134, %s139
          %s141 = sadd.s32 %s25, %s24
          %s142 = smul.addr %s141, 128
          %s143 = scalar_lea.hbm %s0, %s142
          %s145 = sshll.u32 %s137, 4
          %s146 = int_to_ptr.vmem [resolvable:$true] %s145
          %148 = dma.hbm_to_vmem [thread:$0]  %s143, 128, %s146, %s134
        $region20: #{tpu_custom_call.1} parent=15 // pred_fallthru
          _
        // Predicated region
        $region21: #{tpu_custom_call.1} parent=15 // pred_check
          %p149 = pneg %p79
        $region22: #{tpu_custom_call.1} parent=15 // pred_check_branch
          %151 = sbr.rel (%p149) target = $region24
        $region23: #{tpu_custom_call.1} parent=15 // pred_region
          %s152 = sand.u32 %s69, 1
          %s153 = scalar_lea.sflag [#allocation7], %s152
          %s154 = sand.u32 %s69, 1
          %s155 = smul.addr %s154, 8
          %s156 = scalar_lea.vmem [#allocation6], %s155
          %s158 = ssub.s32 128, 128
          %159 = vsyncadd %s153, %s158
          %s160 = sadd.s32 %s25, %s24
          %s161 = smul.addr %s160, 128
          %s162 = scalar_lea.hbm %s1, %s161
          %s164 = sshll.u32 %s156, 4
          %s165 = int_to_ptr.vmem [resolvable:$true] %s164
          %167 = dma.hbm_to_vmem [thread:$0]  %s162, 128, %s165, %s153
        $region24: #{tpu_custom_call.1} parent=15 // pred_fallthru
          _
      $region16: #{tpu_custom_call.1} parent=5 // pred_fallthru
        _
      %p168 = scmp.le.s32.totalorder 1, %s17
      %p169 = scmp.lt.s32.totalorder %s17, 3
      %p170 = pnand %p168, %p169
      %p171 = pneg %p170
      // Predicated region
      $region25: #{tpu_custom_call.1} parent=5 // pred_check
        _
      $region26: #{tpu_custom_call.1} parent=5 // pred_check_branch
        %173 = sbr.rel (%p170) target = $region28
      $region27: #{tpu_custom_call.1} parent=5 // pred_region
        %s174 = ssub.s32 %s17, 1
        %s175 = sand.u32 %s44, 1
        %s176 = scalar_lea.sflag [#allocation4], %s175
        %s177 = sand.u32 %s44, 1
        %s178 = smul.addr %s177, 8
        %s179 = scalar_lea.vmem [#allocation3], %s178
        // Predicated region
        $region29: #{tpu_custom_call.1} parent=27 // pred_check
          %p180 = pneg %p57
        $region30: #{tpu_custom_call.1} parent=27 // pred_check_branch
          %182 = sbr.rel (%p180) target = $region32
        $region31: #{tpu_custom_call.1} parent=27 // pred_region
          %183 = dma.done %s176, 128
        $region32: #{tpu_custom_call.1} parent=27 // pred_fallthru
          _
        %s184 = sand.u32 %s72, 1
        %s185 = scalar_lea.sflag [#allocation7], %s184
        %s186 = sand.u32 %s72, 1
        %s187 = smul.addr %s186, 8
        %s188 = scalar_lea.vmem [#allocation6], %s187
        // Predicated region
        $region33: #{tpu_custom_call.1} parent=27 // pred_check
          %p189 = pneg %p85
        $region34: #{tpu_custom_call.1} parent=27 // pred_check_branch
          %191 = sbr.rel (%p189) target = $region36
        $region35: #{tpu_custom_call.1} parent=27 // pred_region
          %192 = dma.done %s185, 128
        $region36: #{tpu_custom_call.1} parent=27 // pred_fallthru
          _
        %s193 = sand.u32 %s44, 1
        %s194 = scalar_lea.sflag [#allocation4], %s193
        %s195 = sand.u32 %s44, 1
        %s196 = smul.addr %s195, 8
        %s197 = scalar_lea.vmem [#allocation3], %s196
        %p198 = pneg %p57
        %p199 = pneg %p54
        %s200 = sand.u32 %s72, 1
        %s201 = scalar_lea.sflag [#allocation7], %s200
        %s202 = sand.u32 %s72, 1
        %s203 = smul.addr %s202, 8
        %s204 = scalar_lea.vmem [#allocation6], %s203
        %p205 = pneg %p85
        %p206 = pneg %p82
        %p207 = pneg %p111
        %p208 = pneg %p108
        %s209 = sand.u32 %s98, 1
        %s210 = scalar_lea.sflag [#allocation5], %s209
        %s211 = sand.u32 %s98, 1
        %s212 = smul.addr %s211, 8
        %s213 = scalar_lea.vmem [#allocation8], %s212
        %p214 = scmp.eq.s32.totalorder %s27, 0
        // Predicated region
        $region37: #{tpu_custom_call.1} parent=27 // pred_check
          %p215 = pneg %p214
        $region38: #{tpu_custom_call.1} parent=27 // pred_check_branch
          %217 = sbr.rel (%p215) target = $region40
        $region39: #{tpu_custom_call.1} parent=27 // pred_region
          %s218 = scalar_lea.smem [#allocation2], 0
          %219 = sst [smem:[%s218]] 0.0
          %s220 = scalar_lea.smem [#allocation2], 1
          %221 = sst [smem:[%s220]] 0.0
          %s222 = scalar_lea.smem [#allocation2], 2
          %223 = sst [smem:[%s222]] 0.0
        $region40: #{tpu_custom_call.1} parent=27 // pred_fallthru
          _
        %v224 = vld [vmem:[%s179] sm:$0xff]
        %v225 = vld [vmem:[%s188] sm:$0xff]
        %s226 = sld [smem:[#allocation2]]
        %v227 = vmul.f32 %v224, %v225
        %228 = vadd.xlane.f32.xlu0 %v227
        %v229 = vpop.xlane.xlu0 %228
        %v230 = vrot.slane %v229, 4
        %v231 = vadd.f32 %v229, %v230
        %v232 = vrot.slane %v231, 2
        %v233 = vadd.f32 %v231, %v232
        %v234 = vrot.slane %v233, 1
        %v235 = vadd.f32 %v233, %v234
        %s236 = vtos %v235
        %s237 = sadd.f32 %s226, %s236
        %s238 = scalar_lea.smem [#allocation2], 0
        %239 = sst [smem:[%s238]] %s237
        %s240 = sld [smem:[#allocation2 + $0x1]]
        %241 = vadd.xlane.f32.xlu0 %v224
        %v242 = vpop.xlane.xlu0 %241
        %v243 = vrot.slane %v242, 4
        %v244 = vadd.f32 %v242, %v243
        %v245 = vrot.slane %v244, 2
        %v246 = vadd.f32 %v244, %v245
        %v247 = vrot.slane %v246, 1
        %v248 = vadd.f32 %v246, %v247
        %s249 = vtos %v248
        %s250 = sadd.f32 %s240, %s249
        %s251 = scalar_lea.smem [#allocation2], 1
        %252 = sst [smem:[%s251]] %s250
        %s253 = sld [smem:[#allocation2 + $0x2]]
        %254 = vadd.xlane.f32.xlu0 %v225
        %v255 = vpop.xlane.xlu0 %254
        %v256 = vrot.slane %v255, 4
        %v257 = vadd.f32 %v255, %v256
        %v258 = vrot.slane %v257, 2
        %v259 = vadd.f32 %v257, %v258
        %v260 = vrot.slane %v259, 1
        %v261 = vadd.f32 %v259, %v260
        %s262 = vtos %v261
        %s263 = sadd.f32 %s253, %s262
        %s264 = scalar_lea.smem [#allocation2], 2
        %265 = sst [smem:[%s264]] %s263
        // Predicated region
        $region41: #{tpu_custom_call.1} parent=27 // pred_check
          %p266 = pneg %p214
        $region42: #{tpu_custom_call.1} parent=27 // pred_check_branch
          %268 = sbr.rel (%p266) target = $region44
        $region43: #{tpu_custom_call.1} parent=27 // pred_region
          %s269 = sld [smem:[#allocation2]]
          %s270 = sld [smem:[#allocation2 + $0x1]]
          %s271 = sld [smem:[#allocation2 + $0x2]]
          %s272 = sadd.f32 %s270, %s271
          %s273 = sadd.f32 %s272, 1.0
          %s274 = smul.f32 %s269, 2.0
          %v275 = vstv %s273
          %v276 = vrcp.pop %v275
          %s277 = vtos %v276
          %s278 = smul.f32 %s274, %s277
          %s279 = ssub.f32 1.0, %s278
          %v280 = vstv %s279
          %281 = vst [vmem:[%s213] sm:$0xff] %v280
        $region44: #{tpu_custom_call.1} parent=27 // pred_fallthru
          _
        %s282 = sand.u32 %s98, 1
        %s283 = scalar_lea.sflag [#allocation5], %s282
        %s284 = sand.u32 %s98, 1
        %s285 = smul.addr %s284, 8
        %s286 = scalar_lea.vmem [#allocation8], %s285
        // Predicated region
        $region45: #{tpu_custom_call.1} parent=27 // pred_check
          %p287 = pneg %p108
        $region46: #{tpu_custom_call.1} parent=27 // pred_check_branch
          %289 = sbr.rel (%p287) target = $region48
        $region47: #{tpu_custom_call.1} parent=27 // pred_region
          %s291 = ssub.s32 128, 128
          %292 = vsyncadd %s283, %s291
          %s293 = smul.addr %s26, 128
          %s294 = scalar_lea.hbm %s2, %s293
          %s296 = sshll.u32 %s286, 4
          %s297 = int_to_ptr.vmem [resolvable:$true] %s296
          %299 = dma.vmem_to_hbm [thread:$0]  %s297, 128, %s294, %s283
        $region48: #{tpu_custom_call.1} parent=27 // pred_fallthru
          _
      $region28: #{tpu_custom_call.1} parent=5 // pred_fallthru
        _
      %p300 = scmp.le.s32.totalorder 2, %s17
      // Predicated region
      $region49: #{tpu_custom_call.1} parent=5 // pred_check
        %p301 = pneg %p300
      $region50: #{tpu_custom_call.1} parent=5 // pred_check_branch
        %303 = sbr.rel (%p301) target = $region52
      $region51: #{tpu_custom_call.1} parent=5 // pred_region
        %s304 = ssub.s32 %s17, 2
        // Predicated region
        $region53: #{tpu_custom_call.1} parent=51 // pred_check
          %p305 = pneg %p114
        $region54: #{tpu_custom_call.1} parent=51 // pred_check_branch
          %307 = sbr.rel (%p305) target = $region56
        $region55: #{tpu_custom_call.1} parent=51 // pred_region
          %s308 = sand.u32 %s99, 1
          %s309 = scalar_lea.sflag [#allocation5], %s308
          %s310 = sand.u32 %s99, 1
          %s311 = smul.addr %s310, 8
          %s312 = scalar_lea.vmem [#allocation8], %s311
          %313 = dma.done %s309, 128
        $region56: #{tpu_custom_call.1} parent=51 // pred_fallthru
          _
      $region52: #{tpu_custom_call.1} parent=5 // pred_fallthru
        _
    $region6: #{tpu_custom_call.1} parent=1 // loop_footer
      %s21 = sadd.s32 1, %s17
    $region7: #{tpu_custom_call.1} parent=1 // loop_footer_branch
      %16 = sbr.rel target = $region3
    $region8: #{tpu_custom_call.1} parent=1 // loop_exit
      _
    %314 = vsyncpa [#allocation4], 1
    %s315 = scalar_lea.sflag [#allocation4], 1
    %316 = vsyncpa %s315, 1
    %317 = vsyncpa [#allocation7], 1
    %s318 = scalar_lea.sflag [#allocation7], 1
    %319 = vsyncpa %s318, 1
    %320 = vsyncpa [#allocation5], 1
    %s321 = scalar_lea.sflag [#allocation5], 1
    %322 = vsyncpa %s321, 1

</llo_original>
